<compile_context>
chip_gen: v7x
topology: tpu7x:2x2x1
jax: 0.10.0
libtpu: 0.0.40
codegen_flags: <defaults>
</compile_context>

<pallas_src>
import functools

import jax
import jax.numpy as jnp
from jax.experimental import pallas as pl
from jax.experimental.pallas import tpu as pltpu


def _fold_bn(gamma, beta, running_mean, running_var, eps=1e-5):
    scale = gamma / jnp.sqrt(running_var + eps)
    bias = beta - running_mean * scale
    return scale, bias


def _band_toeplitz(w_f, W):
    """(3, 3, Ci, Co) HWIO weights -> (3, W*Ci, W*Co) banded block-Toeplitz mats.

    T[dy][wi*Ci+ci, wo*Co+co] = w_f[dy, wi-wo+1, ci, co] when wi-wo+1 in [0, 3),
    else 0.  The conv's W zero-padding (padding=1) is folded in: out-of-band taps
    are simply zero columns/rows of the matrix.
    """
    Kh, Kw, Ci, Co = w_f.shape
    wi = jnp.arange(W)[:, None]
    wo = jnp.arange(W)[None, :]
    dx = wi - wo + 1                                   # (W, W)
    valid = (dx >= 0) & (dx < Kw)
    dxc = jnp.clip(dx, 0, Kw - 1)
    T = w_f[:, dxc]                                    # (3, W, W, Ci, Co)
    T = T * valid[None, :, :, None, None].astype(w_f.dtype)
    T = jnp.transpose(T, (0, 1, 3, 2, 4)).reshape(Kh, W * Ci, W * Co)
    return T


def _vmem_capacity_bytes():
    try:
        return int(pltpu.get_tpu_info().vmem_capacity_bytes)
    except Exception:
        return 64 * 2**20          # conservative fallback: v7x per-TensorCore VMEM


def _pick_group(N, P, per_row_bytes, budget_bytes, max_rows=2048):
    """Largest divisor G of N whose G*P-row block fits the VMEM budget.

    Once the matmul M dimension (G*P) is already >=128 rows, prefer a G that
    still leaves >=2 grid steps so a v7x megacore gets balanced work.
    """
    def fits(g):
        return g * P <= max_rows and g * P * per_row_bytes <= budget_bytes
    divs = [g for g in range(1, N + 1) if N % g == 0 and fits(g)]
    if not divs:
        return 1
    pref = [g for g in divs if N // g >= 2 and g * P >= 128]
    return max(pref) if pref else max(divs)


def _fused_double_conv_kernel(x_ref, w1_ref, w2_ref, b1_ref, b2_ref,
                              o_ref, h_ref, *, G, P, L_mid, L_out):
    # x_ref : (1, G*P, L_in)  flat group of G images, each P = H+2 rows
    #         (row 0 / row P-1 of every image are conv1's zero padding rows).
    # w1_ref: (3, L_in,  L_mid)  stage-1 Toeplitz weights (BN1 scale folded)
    # w2_ref: (3, L_mid, L_out)  stage-2 Toeplitz weights (BN2 scale folded)
    # b1_ref: (1, L_mid)  b2_ref: (1, L_out)   folded BN biases
    # o_ref : (1, G*P, L_out)  flat output (rows 1..H of each period are valid)
    # h_ref : (G*P, L_mid) VMEM scratch holding the padded intermediate
    GP = G * P
    M = GP - 2
    x = x_ref[0]                                       # (GP, L_in)

    # ---- stage 1: conv1 (+ folded BN1) + ReLU, interior rows only ----------
    acc1 = jnp.zeros((M, L_mid), jnp.float32)
    for dy in range(3):                                # 3 row-shifted matmuls
        acc1 = acc1 + jnp.dot(x[dy:dy + M, :], w1_ref[dy],
                              preferred_element_type=jnp.float32)
    h_ref[1:GP - 1, :] = jnp.maximum(acc1 + b1_ref[...], 0.0)

    # Per-image H-padding rows of the intermediate are conv2's zero padding:
    # overwrite exactly 2 rows per image (no full-tile iota/select mask).
    zrow = jnp.zeros((1, L_mid), jnp.float32)
    for n in range(G):
        h_ref[n * P:n * P + 1, :] = zrow               # top pad of image n
        h_ref[(n + 1) * P - 1:(n + 1) * P, :] = zrow   # bottom pad of image n

    # ---- stage 2: conv2 (+ folded BN2) + ReLU -------------------------------
    acc2 = jnp.zeros((M, L_out), jnp.float32)
    for dy in range(3):
        lhs = h_ref[dy:dy + M, :].astype(w2_ref.dtype)
        acc2 = acc2 + jnp.dot(lhs, w2_ref[dy],
                              preferred_element_type=jnp.float32)
    o_ref[0, 1:GP - 1, :] = jnp.maximum(acc2 + b2_ref[...], 0.0).astype(o_ref.dtype)

    # Keep the (discarded) per-group edge rows defined.
    zout = jnp.zeros((1, L_out), o_ref.dtype)
    o_ref[0, 0:1, :] = zout
    o_ref[0, GP - 1:GP, :] = zout


def double_conv_2d(x_nchw, params, *, matmul_dtype=jnp.bfloat16,
                   images_per_step=None):
    """Forward pass of DoubleConv_2d.  Input/output are NCHW (PyTorch layout)."""
    N, Cin, H, W = x_nchw.shape
    Cmid = params["conv1_w"].shape[0]
    Cout = params["conv2_w"].shape[0]
    cd = jnp.dtype(matmul_dtype).itemsize

    s1, b1 = _fold_bn(params["bn1_gamma"], params["bn1_beta"],
                      params["bn1_mean"], params["bn1_var"])
    s2, b2 = _fold_bn(params["bn2_gamma"], params["bn2_beta"],
                      params["bn2_mean"], params["bn2_var"])

    # OIHW -> HWIO, fold the BN scale into the output channels, build Toeplitz.
    w1f = jnp.transpose(params["conv1_w"], (2, 3, 1, 0)) * s1[None, None, None, :]
    w2f = jnp.transpose(params["conv2_w"], (2, 3, 1, 0)) * s2[None, None, None, :]
    T1 = _band_toeplitz(w1f, W).astype(matmul_dtype)       # (3, W*Cin,  W*Cmid)
    T2 = _band_toeplitz(w2f, W).astype(matmul_dtype)       # (3, W*Cmid, W*Cout)
    bias1 = jnp.tile(b1, W).reshape(1, W * Cmid).astype(jnp.float32)
    bias2 = jnp.tile(b2, W).reshape(1, W * Cout).astype(jnp.float32)

    L_in, L_mid, L_out = W * Cin, W * Cmid, W * Cout
    P = H + 2                                              # per-image row period

    # --- generation-aware group size & VMEM budget ---------------------------
    cap = _vmem_capacity_bytes()
    per_row = (6 * L_in * cd            # double-buffered input + shifted copies
               + 2 * L_out * 4          # double-buffered output
               + L_mid * 4              # intermediate scratch
               + 2 * (L_mid + L_out) * 4)                  # f32 accumulators
    weight_bytes = (2 * 3 * (L_in * L_mid + L_mid * L_out) * cd   # dbl-buffered
                    + 2 * (L_mid + L_out) * 4)
    if images_per_step is None:
        budget = max(int(0.45 * cap) - weight_bytes, per_row * P)
        G = _pick_group(N, P, per_row, budget)
    else:
        G = int(images_per_step)
    assert N % G == 0, (N, G)
    NG = N // G
    GP = G * P

    est = GP * per_row + weight_bytes
    vmem_limit = int(min(0.9 * cap, max(32 * 2**20, 1.5 * est)))

    # NCHW -> (N, H, W*Cin), pad H by 1 row each side (conv1 halo), flatten the
    # G-image groups onto a single row axis.  No W pad, no band gather.
    x = jnp.transpose(x_nchw, (0, 2, 3, 1)).reshape(N, H, L_in)
    x = jnp.pad(x, ((0, 0), (1, 1), (0, 0)))
    x = x.reshape(NG, GP, L_in).astype(matmul_dtype)

    kernel = functools.partial(_fused_double_conv_kernel,
                               G=G, P=P, L_mid=L_mid, L_out=L_out)

    out = pl.pallas_call(
        kernel,
        out_shape=jax.ShapeDtypeStruct((NG, GP, L_out), jnp.float32),
        grid_spec=pltpu.PrefetchScalarGridSpec(
            num_scalar_prefetch=0,
            grid=(NG,),
            in_specs=[
                pl.BlockSpec((1, GP, L_in), lambda g: (g, 0, 0)),
                pl.BlockSpec((3, L_in, L_mid), lambda g: (0, 0, 0)),
                pl.BlockSpec((3, L_mid, L_out), lambda g: (0, 0, 0)),
                pl.BlockSpec((1, L_mid), lambda g: (0, 0)),
                pl.BlockSpec((1, L_out), lambda g: (0, 0)),
            ],
            out_specs=pl.BlockSpec((1, GP, L_out), lambda g: (g, 0, 0)),
            scratch_shapes=[pltpu.VMEM((GP, L_mid), jnp.float32)],
        ),
        compiler_params=pltpu.CompilerParams(
            dimension_semantics=("parallel",),
            vmem_limit_bytes=vmem_limit,
        ),
    )(x, T1, T2, bias1, bias2)

    # Drop the 2 padding rows per image, un-flatten lanes, back to NCHW.
    out = out.reshape(N, P, L_out)[:, 1:H + 1, :].reshape(N, H, W, Cout)
    return jnp.transpose(out, (0, 3, 1, 2))


def init_params(key, in_channels, out_channels, mid_channels=None):
    if not mid_channels:
        mid_channels = out_channels
    ks = jax.random.split(key, 10)
    return {
        "conv1_w": 0.1 * jax.random.normal(
            ks[0], (mid_channels, in_channels, 3, 3), jnp.float32),
        "bn1_gamma": 1.0 + 0.1 * jax.random.normal(ks[1], (mid_channels,), jnp.float32),
        "bn1_beta": 0.1 * jax.random.normal(ks[2], (mid_channels,), jnp.float32),
        "bn1_mean": 0.1 * jax.random.normal(ks[3], (mid_channels,), jnp.float32),
        "bn1_var": jax.random.uniform(ks[4], (mid_channels,), jnp.float32, 0.5, 1.5),
        "conv2_w": 0.1 * jax.random.normal(
            ks[5], (out_channels, mid_channels, 3, 3), jnp.float32),
        "bn2_gamma": 1.0 + 0.1 * jax.random.normal(ks[6], (out_channels,), jnp.float32),
        "bn2_beta": 0.1 * jax.random.normal(ks[7], (out_channels,), jnp.float32),
        "bn2_mean": 0.1 * jax.random.normal(ks[8], (out_channels,), jnp.float32),
        "bn2_var": jax.random.uniform(ks[9], (out_channels,), jnp.float32, 0.5, 1.5),
    }


def _reference(x_nchw, params):
    """Pure-JAX reference (lax conv) for a correctness sanity-check."""
    x = jnp.transpose(x_nchw, (0, 2, 3, 1))

    def stage(x, w_oihw, gamma, beta, mean, var):
        w = jnp.transpose(w_oihw, (2, 3, 1, 0))
        y = jax.lax.conv_general_dilated(
            x, w, window_strides=(1, 1), padding="SAME",
            dimension_numbers=("NHWC", "HWIO", "NHWC"))
        s, b = _fold_bn(gamma, beta, mean, var)
        return jnp.maximum(y * s + b, 0.0)

    h = stage(x, params["conv1_w"], params["bn1_gamma"], params["bn1_beta"],
              params["bn1_mean"], params["bn1_var"])
    y = stage(h, params["conv2_w"], params["bn2_gamma"], params["bn2_beta"],
              params["bn2_mean"], params["bn2_var"])
    return jnp.transpose(y, (0, 3, 1, 2))


if __name__ == "__main__":
    key = jax.random.PRNGKey(0)
    k_x, k_p = jax.random.split(key)

    N, Cin, Cout, H, W = 2, 4, 8, 16, 16
    x = jax.random.normal(k_x, (N, Cin, H, W), jnp.float32)   # NCHW, like PyTorch
    params = init_params(k_p, Cin, Cout)

    ref = jax.block_until_ready(_reference(x, params))

    # Default path: bf16 MXU operands, f32 accumulation.
    out = jax.block_until_ready(double_conv_2d(x, params))
    assert out.shape == (N, Cout, H, W), out.shape
    assert jnp.allclose(out, ref, atol=5e-2, rtol=5e-2), float(
        jnp.max(jnp.abs(out - ref)))

    # f32-operand path: matches PyTorch-grade numerics.
    out32 = jax.block_until_ready(double_conv_2d(x, params,
                                                 matmul_dtype=jnp.float32))
    assert jnp.allclose(out32, ref, atol=2e-4, rtol=2e-4), float(
        jnp.max(jnp.abs(out32 - ref)))

    print("KERNEL_OK")
</pallas_src>

<mosaic_0001>
module attributes {stable_mosaic.version = 11 : i64} {
  func.func @_fused_double_conv_kernel(%arg0: i32, %arg1: memref<1x36x64xbf16, #tpu.memory_space<vmem>>, %arg2: memref<3x64x128xbf16, #tpu.memory_space<vmem>>, %arg3: memref<3x128x128xbf16, #tpu.memory_space<vmem>>, %arg4: memref<1x128xf32, #tpu.memory_space<vmem>>, %arg5: memref<1x128xf32, #tpu.memory_space<vmem>>, %arg6: memref<1x36x128xf32, #tpu.memory_space<vmem>>, %arg7: memref<36x128xf32, #tpu.memory_space<vmem>>) attributes {dimension_semantics = [#tpu.dimension_semantics<parallel>], iteration_bounds = array<i64: 1>, scalar_prefetch = 0 : i64, scratch_operands = 1 : i64, tpu.core_type = #tpu.core_type<tc>, window_params = [{transform_indices = @transform_0, window_bounds = array<i64: 1, 36, 64>}, {pipeline_mode = #tpu.pipeline_mode<synchronous>, transform_indices = @transform_1, window_bounds = array<i64: 3, 64, 128>}, {pipeline_mode = #tpu.pipeline_mode<synchronous>, transform_indices = @transform_2, window_bounds = array<i64: 3, 128, 128>}, {pipeline_mode = #tpu.pipeline_mode<synchronous>, transform_indices = @transform_3, window_bounds = array<i64: 1, 128>}, {pipeline_mode = #tpu.pipeline_mode<synchronous>, transform_indices = @transform_4, window_bounds = array<i64: 1, 128>}, {transform_indices = @transform_5, window_bounds = array<i64: 1, 36, 128>}]} {
    %c0 = arith.constant 0 : index
    %c0_0 = arith.constant 0 : index
    %c0_1 = arith.constant 0 : index
    %0 = vector.load %arg1[%c0, %c0_0, %c0_1] : memref<1x36x64xbf16, #tpu.memory_space<vmem>>, vector<1x36x64xbf16>
    %1 = vector.shape_cast %0 : vector<1x36x64xbf16> to vector<36x64xbf16>
    %cst = arith.constant 0.000000e+00 : f32
    %2 = vector.broadcast %cst : f32 to vector<34x128xf32>
    %3 = vector.extract_strided_slice %1 {offsets = [0, 0], sizes = [34, 64], strides = [1, 1]} : vector<36x64xbf16> to vector<34x64xbf16>
    %c0_2 = arith.constant 0 : index
    %c0_3 = arith.constant 0 : index
    %c0_4 = arith.constant 0 : index
    %4 = vector.load %arg2[%c0_2, %c0_3, %c0_4] : memref<3x64x128xbf16, #tpu.memory_space<vmem>>, vector<1x64x128xbf16>
    %5 = vector.shape_cast %4 : vector<1x64x128xbf16> to vector<64x128xbf16>
    %cst_5 = arith.constant dense<0.000000e+00> : vector<34x128xf32>
    %6 = tpu.matmul %3, %5, %cst_5 {dimension_numbers = #tpu.dot_dimension_numbers<[1], [0], [0], [1], [0, 0, 1, 1], [], []>} : vector<34x64xbf16>, vector<64x128xbf16>, vector<34x128xf32> -> vector<34x128xf32>
    %7 = arith.addf %2, %6 : vector<34x128xf32>
    %8 = vector.extract_strided_slice %1 {offsets = [1, 0], sizes = [34, 64], strides = [1, 1]} : vector<36x64xbf16> to vector<34x64xbf16>
    %c1 = arith.constant 1 : index
    %c0_6 = arith.constant 0 : index
    %c0_7 = arith.constant 0 : index
    %9 = vector.load %arg2[%c1, %c0_6, %c0_7] : memref<3x64x128xbf16, #tpu.memory_space<vmem>>, vector<1x64x128xbf16>
    %10 = vector.shape_cast %9 : vector<1x64x128xbf16> to vector<64x128xbf16>
    %cst_8 = arith.constant dense<0.000000e+00> : vector<34x128xf32>
    %11 = tpu.matmul %8, %10, %cst_8 {dimension_numbers = #tpu.dot_dimension_numbers<[1], [0], [0], [1], [0, 0, 1, 1], [], []>} : vector<34x64xbf16>, vector<64x128xbf16>, vector<34x128xf32> -> vector<34x128xf32>
    %12 = arith.addf %7, %11 : vector<34x128xf32>
    %13 = vector.extract_strided_slice %1 {offsets = [2, 0], sizes = [34, 64], strides = [1, 1]} : vector<36x64xbf16> to vector<34x64xbf16>
    %c2 = arith.constant 2 : index
    %c0_9 = arith.constant 0 : index
    %c0_10 = arith.constant 0 : index
    %14 = vector.load %arg2[%c2, %c0_9, %c0_10] : memref<3x64x128xbf16, #tpu.memory_space<vmem>>, vector<1x64x128xbf16>
    %15 = vector.shape_cast %14 : vector<1x64x128xbf16> to vector<64x128xbf16>
    %cst_11 = arith.constant dense<0.000000e+00> : vector<34x128xf32>
    %16 = tpu.matmul %13, %15, %cst_11 {dimension_numbers = #tpu.dot_dimension_numbers<[1], [0], [0], [1], [0, 0, 1, 1], [], []>} : vector<34x64xbf16>, vector<64x128xbf16>, vector<34x128xf32> -> vector<34x128xf32>
    %17 = arith.addf %12, %16 : vector<34x128xf32>
    %c0_12 = arith.constant 0 : index
    %c0_13 = arith.constant 0 : index
    %18 = vector.load %arg4[%c0_12, %c0_13] : memref<1x128xf32, #tpu.memory_space<vmem>>, vector<1x128xf32>
    %19 = vector.broadcast %18 : vector<1x128xf32> to vector<34x128xf32>
    %20 = arith.addf %17, %19 : vector<34x128xf32>
    %cst_14 = arith.constant 0.000000e+00 : f32
    %21 = vector.broadcast %cst_14 : f32 to vector<34x128xf32>
    %22 = arith.maximumf %20, %21 : vector<34x128xf32>
    %c1_15 = arith.constant 1 : index
    %c0_16 = arith.constant 0 : index
    %23 = vector.load %arg7[%c1_15, %c0_16] : memref<36x128xf32, #tpu.memory_space<vmem>>, vector<34x128xf32>
    tpu.vector_store %arg7[%c1_15, %c0_16], %22 {strides = array<i32>} : memref<36x128xf32, #tpu.memory_space<vmem>>, vector<34x128xf32>,
    %cst_17 = arith.constant 0.000000e+00 : f32
    %24 = vector.broadcast %cst_17 : f32 to vector<1x128xf32>
    %c0_18 = arith.constant 0 : index
    %c0_19 = arith.constant 0 : index
    %25 = vector.load %arg7[%c0_18, %c0_19] : memref<36x128xf32, #tpu.memory_space<vmem>>, vector<1x128xf32>
    tpu.vector_store %arg7[%c0_18, %c0_19], %24 {strides = array<i32>} : memref<36x128xf32, #tpu.memory_space<vmem>>, vector<1x128xf32>,
    %c17 = arith.constant 17 : index
    %c0_20 = arith.constant 0 : index
    %26 = vector.load %arg7[%c17, %c0_20] : memref<36x128xf32, #tpu.memory_space<vmem>>, vector<1x128xf32>
    tpu.vector_store %arg7[%c17, %c0_20], %24 {strides = array<i32>} : memref<36x128xf32, #tpu.memory_space<vmem>>, vector<1x128xf32>,
    %c18 = arith.constant 18 : index
    %c0_21 = arith.constant 0 : index
    %27 = vector.load %arg7[%c18, %c0_21] : memref<36x128xf32, #tpu.memory_space<vmem>>, vector<1x128xf32>
    tpu.vector_store %arg7[%c18, %c0_21], %24 {strides = array<i32>} : memref<36x128xf32, #tpu.memory_space<vmem>>, vector<1x128xf32>,
    %c35 = arith.constant 35 : index
    %c0_22 = arith.constant 0 : index
    %28 = vector.load %arg7[%c35, %c0_22] : memref<36x128xf32, #tpu.memory_space<vmem>>, vector<1x128xf32>
    tpu.vector_store %arg7[%c35, %c0_22], %24 {strides = array<i32>} : memref<36x128xf32, #tpu.memory_space<vmem>>, vector<1x128xf32>,
    %cst_23 = arith.constant 0.000000e+00 : f32
    %29 = vector.broadcast %cst_23 : f32 to vector<34x128xf32>
    %c0_24 = arith.constant 0 : index
    %c0_25 = arith.constant 0 : index
    %30 = vector.load %arg7[%c0_24, %c0_25] : memref<36x128xf32, #tpu.memory_space<vmem>>, vector<34x128xf32>
    %31 = arith.truncf %30 : vector<34x128xf32> to vector<34x128xbf16>
    %c0_26 = arith.constant 0 : index
    %c0_27 = arith.constant 0 : index
    %c0_28 = arith.constant 0 : index
    %32 = vector.load %arg3[%c0_26, %c0_27, %c0_28] : memref<3x128x128xbf16, #tpu.memory_space<vmem>>, vector<1x128x128xbf16>
    %33 = vector.shape_cast %32 : vector<1x128x128xbf16> to vector<128x128xbf16>
    %cst_29 = arith.constant dense<0.000000e+00> : vector<34x128xf32>
    %34 = tpu.matmul %31, %33, %cst_29 {dimension_numbers = #tpu.dot_dimension_numbers<[1], [0], [0], [1], [0, 0, 1, 1], [], []>} : vector<34x128xbf16>, vector<128x128xbf16>, vector<34x128xf32> -> vector<34x128xf32>
    %35 = arith.addf %29, %34 : vector<34x128xf32>
    %c1_30 = arith.constant 1 : index
    %c0_31 = arith.constant 0 : index
    %36 = vector.load %arg7[%c1_30, %c0_31] : memref<36x128xf32, #tpu.memory_space<vmem>>, vector<34x128xf32>
    %37 = arith.truncf %36 : vector<34x128xf32> to vector<34x128xbf16>
    %c1_32 = arith.constant 1 : index
    %c0_33 = arith.constant 0 : index
    %c0_34 = arith.constant 0 : index
    %38 = vector.load %arg3[%c1_32, %c0_33, %c0_34] : memref<3x128x128xbf16, #tpu.memory_space<vmem>>, vector<1x128x128xbf16>
    %39 = vector.shape_cast %38 : vector<1x128x128xbf16> to vector<128x128xbf16>
    %cst_35 = arith.constant dense<0.000000e+00> : vector<34x128xf32>
    %40 = tpu.matmul %37, %39, %cst_35 {dimension_numbers = #tpu.dot_dimension_numbers<[1], [0], [0], [1], [0, 0, 1, 1], [], []>} : vector<34x128xbf16>, vector<128x128xbf16>, vector<34x128xf32> -> vector<34x128xf32>
    %41 = arith.addf %35, %40 : vector<34x128xf32>
    %c2_36 = arith.constant 2 : index
    %c0_37 = arith.constant 0 : index
    %42 = vector.load %arg7[%c2_36, %c0_37] : memref<36x128xf32, #tpu.memory_space<vmem>>, vector<34x128xf32>
    %43 = arith.truncf %42 : vector<34x128xf32> to vector<34x128xbf16>
    %c2_38 = arith.constant 2 : index
    %c0_39 = arith.constant 0 : index
    %c0_40 = arith.constant 0 : index
    %44 = vector.load %arg3[%c2_38, %c0_39, %c0_40] : memref<3x128x128xbf16, #tpu.memory_space<vmem>>, vector<1x128x128xbf16>
    %45 = vector.shape_cast %44 : vector<1x128x128xbf16> to vector<128x128xbf16>
    %cst_41 = arith.constant dense<0.000000e+00> : vector<34x128xf32>
    %46 = tpu.matmul %43, %45, %cst_41 {dimension_numbers = #tpu.dot_dimension_numbers<[1], [0], [0], [1], [0, 0, 1, 1], [], []>} : vector<34x128xbf16>, vector<128x128xbf16>, vector<34x128xf32> -> vector<34x128xf32>
    %47 = arith.addf %41, %46 : vector<34x128xf32>
    %c0_42 = arith.constant 0 : index
    %c0_43 = arith.constant 0 : index
    %48 = vector.load %arg5[%c0_42, %c0_43] : memref<1x128xf32, #tpu.memory_space<vmem>>, vector<1x128xf32>
    %49 = vector.broadcast %48 : vector<1x128xf32> to vector<34x128xf32>
    %50 = arith.addf %47, %49 : vector<34x128xf32>
    %cst_44 = arith.constant 0.000000e+00 : f32
    %51 = vector.broadcast %cst_44 : f32 to vector<34x128xf32>
    %52 = arith.maximumf %50, %51 : vector<34x128xf32>
    %c0_45 = arith.constant 0 : index
    %c1_46 = arith.constant 1 : index
    %c0_47 = arith.constant 0 : index
    %53 = vector.load %arg6[%c0_45, %c1_46, %c0_47] : memref<1x36x128xf32, #tpu.memory_space<vmem>>, vector<1x34x128xf32>
    %54 = vector.shape_cast %53 : vector<1x34x128xf32> to vector<34x128xf32>
    %55 = vector.shape_cast %52 : vector<34x128xf32> to vector<1x34x128xf32>
    tpu.vector_store %arg6[%c0_45, %c1_46, %c0_47], %55 {strides = array<i32>} : memref<1x36x128xf32, #tpu.memory_space<vmem>>, vector<1x34x128xf32>,
    %cst_48 = arith.constant 0.000000e+00 : f32
    %56 = vector.broadcast %cst_48 : f32 to vector<1x128xf32>
    %c0_49 = arith.constant 0 : index
    %c0_50 = arith.constant 0 : index
    %c0_51 = arith.constant 0 : index
    %57 = vector.load %arg6[%c0_49, %c0_50, %c0_51] : memref<1x36x128xf32, #tpu.memory_space<vmem>>, vector<1x1x128xf32>
    %58 = vector.shape_cast %57 : vector<1x1x128xf32> to vector<1x128xf32>
    %59 = vector.shape_cast %56 : vector<1x128xf32> to vector<1x1x128xf32>
    tpu.vector_store %arg6[%c0_49, %c0_50, %c0_51], %59 {strides = array<i32>} : memref<1x36x128xf32, #tpu.memory_space<vmem>>, vector<1x1x128xf32>,
    %c0_52 = arith.constant 0 : index
    %c35_53 = arith.constant 35 : index
    %c0_54 = arith.constant 0 : index
    %60 = vector.load %arg6[%c0_52, %c35_53, %c0_54] : memref<1x36x128xf32, #tpu.memory_space<vmem>>, vector<1x1x128xf32>
    %61 = vector.shape_cast %60 : vector<1x1x128xf32> to vector<1x128xf32>
    %62 = vector.shape_cast %56 : vector<1x128xf32> to vector<1x1x128xf32>
    tpu.vector_store %arg6[%c0_52, %c35_53, %c0_54], %62 {strides = array<i32>} : memref<1x36x128xf32, #tpu.memory_space<vmem>>, vector<1x1x128xf32>,
    return
  }
  func.func @transform_0(%arg0: i32) -> (i32, i32, i32) {
    %c0_i32 = arith.constant 0 : i32
    %c0_i32_0 = arith.constant 0 : i32
    %c0_i32_1 = arith.constant 0 : i32
    return %arg0, %c0_i32, %c0_i32_0 : i32, i32, i32
  }
  func.func @transform_1(%arg0: i32) -> (i32, i32, i32) {
    %c0_i32 = arith.constant 0 : i32
    %c0_i32_0 = arith.constant 0 : i32
    %c0_i32_1 = arith.constant 0 : i32
    %c0_i32_2 = arith.constant 0 : i32
    return %c0_i32, %c0_i32_0, %c0_i32_1 : i32, i32, i32
  }
  func.func @transform_2(%arg0: i32) -> (i32, i32, i32) {
    %c0_i32 = arith.constant 0 : i32
    %c0_i32_0 = arith.constant 0 : i32
    %c0_i32_1 = arith.constant 0 : i32
    %c0_i32_2 = arith.constant 0 : i32
    return %c0_i32, %c0_i32_0, %c0_i32_1 : i32, i32, i32
  }
  func.func @transform_3(%arg0: i32) -> (i32, i32) {
    %c0_i32 = arith.constant 0 : i32
    %c0_i32_0 = arith.constant 0 : i32
    %c0_i32_1 = arith.constant 0 : i32
    return %c0_i32, %c0_i32_0 : i32, i32
  }
  func.func @transform_4(%arg0: i32) -> (i32, i32) {
    %c0_i32 = arith.constant 0 : i32
    %c0_i32_0 = arith.constant 0 : i32
    %c0_i32_1 = arith.constant 0 : i32
    return %c0_i32, %c0_i32_0 : i32, i32
  }
  func.func @transform_5(%arg0: i32) -> (i32, i32, i32) {
    %c0_i32 = arith.constant 0 : i32
    %c0_i32_0 = arith.constant 0 : i32
    %c0_i32_1 = arith.constant 0 : i32
    return %arg0, %c0_i32, %c0_i32_0 : i32, i32, i32
  }
}

</mosaic_0001>

<llo_original>
// kernel: tpu_custom_call.1
$region0: #{tpu_custom_call.1}
  #allocation0 [shape = 'u32[]', space=smem, size = 0x4, offset = 0x4, fixed_abs, tag = 'smem constant byte address 0x4 - core index']
  #allocation1 [shape = 'u32[144,128]{1,0:T(1,128)}', space=vmem, size = 0x12000, scoped, tag = 'internal scratch']
  #allocation2 [shape = 'f32[36,128]{1,0:T(8,128)}', space=vmem, size = 0x5000, scoped, tag = 'scratch operand']
  %s0 = inlined_call_operand.hbm [shape: bf16[1,36,64], index: 0, kind: input, shape index: {}]
  %s1 = inlined_call_operand.hbm [shape: bf16[3,64,128], index: 1, kind: input, shape index: {}]
  %s2 = inlined_call_operand.hbm [shape: bf16[3,128,128], index: 2, kind: input, shape index: {}]
  %s3 = inlined_call_operand.vmem [shape: f32[1,128], index: 3, kind: input, shape index: {}]
  %s4 = inlined_call_operand.vmem [shape: f32[1,128], index: 4, kind: input, shape index: {}]
  %s5 = inlined_call_operand.vmem [shape: f32[1,36,128], index: 5, kind: output, shape index: {}]
  %s6 = sld [smem:[#allocation0]]
  $region42: #{tpu_custom_call.1} parent=0
    _
  %s8 = ssub.s32 1, %s6
  %s9 = scalar_select 0, %s8, %s6
  $region1: #{tpu_custom_call.1} parent=0
    #allocation3 [shape = 'u8[10240]{0}', space=vmem, size = 0x2800, scoped, tag = 'input window, operand 0, single buffered']
    #allocation4 [shape = 's32[1]{0}', space=sflag, size = 0x4, scoped, tag = 'scoped memory for tpu_custom_call.1']
    #allocation5 [shape = 'u8[49152]{0}', space=vmem, size = 0xc000, scoped, tag = 'input window, operand 1, single buffered']
    #allocation6 [shape = 's32[1]{0}', space=sflag, size = 0x4, scoped, tag = 'scoped memory for tpu_custom_call.1']
    #allocation7 [shape = 'u8[98304]{0}', space=vmem, size = 0x18000, scoped, tag = 'input window, operand 2, single buffered']
    %10 = vsyncpa [#allocation4], 0
    %11 = vsyncpa [#allocation6], 0
    // Predicated region
    $region2: #{tpu_custom_call.1} parent=1 // pred_check
      _
    $region3: #{tpu_custom_call.1} parent=1 // pred_check_branch
      %13 = sbr.rel (0) target = $region5
    $region4: #{tpu_custom_call.1} parent=1 // pred_region
      %s15 = ssub.s32 320, 320
      %16 = vsyncadd [#allocation4], %s15
      %s17 = sshll.u32 [#allocation3], 4
      %s18 = int_to_ptr.vmem [resolvable:$true] %s17
      %23 = dma.hbm_to_vmem [thread:$0]  %s0, 320, %s18, [#allocation4], 64, 64, 4
    $region5: #{tpu_custom_call.1} parent=1 // pred_fallthru
      _
    // Predicated region
    $region6: #{tpu_custom_call.1} parent=1 // pred_check
      _
    $region7: #{tpu_custom_call.1} parent=1 // pred_check_branch
      %25 = sbr.rel (0) target = $region9
    $region8: #{tpu_custom_call.1} parent=1 // pred_region
      %s27 = ssub.s32 1536, 1536
      %28 = vsyncadd [#allocation6], %s27
      %s29 = sshll.u32 [#allocation5], 4
      %s30 = int_to_ptr.vmem [resolvable:$true] %s29
      %35 = dma.hbm_to_vmem [thread:$0]  %s1, 1536, %s30, [#allocation6], 64, 64, 4
    $region9: #{tpu_custom_call.1} parent=1 // pred_fallthru
      _
    // Predicated region
    $region10: #{tpu_custom_call.1} parent=1 // pred_check
      _
    $region11: #{tpu_custom_call.1} parent=1 // pred_check_branch
      %37 = sbr.rel (0) target = $region13
    $region12: #{tpu_custom_call.1} parent=1 // pred_region
      %s39 = ssub.s32 3072, 3072
      %40 = vsyncadd [#allocation6], %s39
      %s41 = sshll.u32 [#allocation7], 4
      %s42 = int_to_ptr.vmem [resolvable:$true] %s41
      %47 = dma.hbm_to_vmem [thread:$0]  %s2, 3072, %s42, [#allocation6], 64, 64, 4
    $region13: #{tpu_custom_call.1} parent=1 // pred_fallthru
      _
    // Predicated region
    $region14: #{tpu_custom_call.1} parent=1 // pred_check
      _
    $region15: #{tpu_custom_call.1} parent=1 // pred_check_branch
      %49 = sbr.rel (0) target = $region17
    $region16: #{tpu_custom_call.1} parent=1 // pred_region
      _
    $region17: #{tpu_custom_call.1} parent=1 // pred_fallthru
      _
    // Predicated region
    $region18: #{tpu_custom_call.1} parent=1 // pred_check
      _
    $region19: #{tpu_custom_call.1} parent=1 // pred_check_branch
      %51 = sbr.rel (0) target = $region21
    $region20: #{tpu_custom_call.1} parent=1 // pred_region
      _
    $region21: #{tpu_custom_call.1} parent=1 // pred_fallthru
      _
    // Predicated region
    $region22: #{tpu_custom_call.1} parent=1 // pred_check
      _
    $region23: #{tpu_custom_call.1} parent=1 // pred_check_branch
      %53 = sbr.rel (0) target = $region25
    $region24: #{tpu_custom_call.1} parent=1 // pred_region
      %54 = dma.done [#allocation4], 320
    $region25: #{tpu_custom_call.1} parent=1 // pred_fallthru
      _
    // Predicated region
    $region26: #{tpu_custom_call.1} parent=1 // pred_check
      _
    $region27: #{tpu_custom_call.1} parent=1 // pred_check_branch
      %56 = sbr.rel (0) target = $region29
    $region28: #{tpu_custom_call.1} parent=1 // pred_region
      %57 = dma.done [#allocation6], 1536
    $region29: #{tpu_custom_call.1} parent=1 // pred_fallthru
      _
    // Predicated region
    $region30: #{tpu_custom_call.1} parent=1 // pred_check
      _
    $region31: #{tpu_custom_call.1} parent=1 // pred_check_branch
      %59 = sbr.rel (0) target = $region33
    $region32: #{tpu_custom_call.1} parent=1 // pred_region
      %60 = dma.done [#allocation6], 3072
    $region33: #{tpu_custom_call.1} parent=1 // pred_fallthru
      _
    %v62 = vld [vmem:[#allocation3] sm:$0xf]
    %v63 = vld [vmem:[#allocation3 + $0x4] sm:$0xf]
    %v64 = vld [vmem:[#allocation3 + $0x8] sm:$0xf]
    %v65 = vld [vmem:[#allocation3 + $0xc] sm:$0xf]
    %v66 = vld [vmem:[#allocation3 + $0x10] sm:$0x3]
    %v67 = vld [vmem:[#allocation5] sm:$0xf]
    %v68 = vld [vmem:[#allocation5 + $0x4] sm:$0xf]
    %v69 = vld [vmem:[#allocation5 + $0x8] sm:$0xf]
    %v70 = vld [vmem:[#allocation5 + $0xc] sm:$0xf]
    %v71 = vld [vmem:[#allocation5 + $0x10] sm:$0xf]
    %v72 = vld [vmem:[#allocation5 + $0x14] sm:$0xf]
    %v73 = vld [vmem:[#allocation5 + $0x18] sm:$0xf]
    %v74 = vld [vmem:[#allocation5 + $0x1c] sm:$0xf]
    %s75 = scalar_lea.vmem [#allocation5], 32
    %v76 = vld [vmem:[%s75] sm:$0xf]
    %v77 = vld [vmem:[%s75 + $0x4] sm:$0xf]
    %v78 = vld [vmem:[%s75 + $0x8] sm:$0xf]
    %v79 = vld [vmem:[%s75 + $0xc] sm:$0xf]
    %v80 = vld [vmem:[%s75 + $0x10] sm:$0xf]
    %v81 = vld [vmem:[%s75 + $0x14] sm:$0xf]
    %v82 = vld [vmem:[%s75 + $0x18] sm:$0xf]
    %v83 = vld [vmem:[%s75 + $0x1c] sm:$0xf]
    %v89 = vunpack.c.l.b16 %v62
    %v90 = vunpack.c.l.b16 %v63
    %v91 = vunpack.c.l.b16 %v64
    %v92 = vunpack.c.l.b16 %v65
    %v93 = vunpack.c.l.b16 %v66
    %v94 = vpack.c.b16 %v90, %v89
    %v95 = vpack.c.b16 %v92, %v91
    %v96 = vpack.c.b16 %v93, %v93
    %vm97 = vsmask.f32 7424
    %v99 = vshrl.u32 %v94, 16
    %v101 = vshll.u32 %v94, 16
    %v103 = vrot.slane %v101, 1
    %v104 = vor.u32 %v99, %v103
    %v106 = vshll.u32 %v95, 16
    %v108 = vrot.slane %v106, 1
    %v109 = vsel %vm97, %v104, %v108
    %v110 = vshrl.u32 %v95, 16
    %v112 = vor.u32 %v110, %v108
    %v114 = vshll.u32 %v96, 16
    %v116 = vrot.slane %v114, 1
    %v117 = vsel %vm97, %v112, %v116
    %v118 = vshrl.u32 %v96, 16
    %v120 = vor.u32 %v118, %v116
    %v129 = vunpack.c.l.b16 %v76
    %v130 = vunpack.c.l.b16 %v77
    %v131 = vunpack.c.l.b16 %v78
    %v132 = vunpack.c.l.b16 %v79
    %v133 = vunpack.c.l.b16 %v80
    %v134 = vunpack.c.l.b16 %v81
    %v135 = vunpack.c.l.b16 %v82
    %v136 = vunpack.c.l.b16 %v83
    %v137 = vpack.c.b16 %v130, %v129
    %v138 = vpack.c.b16 %v132, %v131
    %v139 = vpack.c.b16 %v134, %v133
    %v140 = vpack.c.b16 %v136, %v135
    %vm145 = vcmask 523264
    %v147 = vsel %vm145, %v109, 0
    %v150 = vsel %vm145, %v117, 0
    %v153 = vsel %vm145, %v120, 0
    %155 = vmatprep.subr.bf16.mxu0 0
    %156 = vmatpush1.bf16.msra.mxu0 %v137
    %157 = vmatprep.subr.bf16.mxu0 0
    %158 = vmatpush1.bf16.msra.mxu0 %v138
    %159 = vmatprep.subr.bf16.mxu0 0
    %160 = vmatpush1.bf16.msra.mxu0 %v139
    %161 = vmatprep.subr.bf16.mxu0 0
    %162 = vmatpush1.bf16.msra.mxu0 %v140
    %163 = vmatprep.subr.bf16.mxu0 0
    %164 = vmatpush1.bf16.msra.mxu0 0
    %165 = vmatprep.subr.bf16.mxu0 0
    %166 = vmatpush1.bf16.msra.mxu0 0
    %167 = vmatprep.subr.bf16.mxu0 0
    %168 = vmatpush1.bf16.msra.mxu0 0
    %169 = vmatprep.subr.bf16.mxu0 0
    %170 = vmatpush1.bf16.msra.mxu0 0
    %171 = vmatprep.subr.bf16.mxu0 0
    %172 = vmatpush1.bf16.msra.mxu0 0
    %173 = vmatprep.subr.bf16.mxu0 0
    %174 = vmatpush1.bf16.msra.mxu0 0
    %175 = vmatprep.subr.bf16.mxu0 0
    %176 = vmatpush1.bf16.msra.mxu0 0
    %177 = vmatprep.subr.bf16.mxu0 0
    %178 = vmatpush1.bf16.msra.mxu0 0
    %179 = vmatprep.subr.bf16.mxu0 0
    %180 = vmatpush1.bf16.msra.mxu0 0
    %181 = vmatprep.subr.bf16.mxu0 0
    %182 = vmatpush1.bf16.msra.mxu0 0
    %183 = vmatprep.subr.bf16.mxu0 0
    %184 = vmatpush1.bf16.msra.mxu0 0
    %185 = vmatprep.subr.bf16.mxu0 0
    %186 = vmatpush1.bf16.msra.mxu0 0
    %187 = vmatprep.mubr.bf16.mxu0 0
    %188 = vmatmul.mubr.bf16.gmra.mrb[0].mxu0 %v147
    %v189 = vpop.f32.mrb[0].mxu0
    %v190 = vadd.f32 0.0, %v189
    %v191 = vpop.f32.mrb[0].mxu0
    %v192 = vpop.f32.mrb[0].mxu0
    %v193 = vadd.f32 0.0, %v192
    %v194 = vpop.f32.mrb[0].mxu0
    %195 = vmatprep.mubr.bf16.mxu0 0
    %196 = vmatmul.mubr.bf16.gmra.mrb[0].mxu0 %v150
    %v197 = vpop.f32.mrb[0].mxu0
    %v198 = vadd.f32 0.0, %v197
    %v199 = vpop.f32.mrb[0].mxu0
    %v200 = vpop.f32.mrb[0].mxu0
    %v201 = vadd.f32 0.0, %v200
    %v202 = vpop.f32.mrb[0].mxu0
    %203 = vmatprep.mubr.bf16.mxu0 0
    %204 = vmatmul.mubr.bf16.gmra.mrb[0].mxu0 %v153
    %v205 = vpop.f32.mrb[0].mxu0
    %v206 = vadd.f32 0.0, %v205
    %v207 = vpop.f32.mrb[0].mxu0
    %v208 = vpop.f32.mrb[0].mxu0
    %v209 = vpop.f32.mrb[0].mxu0
    %210 = vdwg.mxu0
    %v219 = vunpack.c.l.b16 %v67
    %v220 = vunpack.c.l.b16 %v68
    %v221 = vunpack.c.l.b16 %v69
    %v222 = vunpack.c.l.b16 %v70
    %v223 = vunpack.c.l.b16 %v71
    %v224 = vunpack.c.l.b16 %v72
    %v225 = vunpack.c.l.b16 %v73
    %v226 = vunpack.c.l.b16 %v74
    %v227 = vpack.c.b16 %v220, %v219
    %v228 = vpack.c.b16 %v222, %v221
    %v229 = vpack.c.b16 %v224, %v223
    %v230 = vpack.c.b16 %v226, %v225
    %v235 = vsel %vm145, %v94, 0
    %v237 = vsel %vm145, %v95, 0
    %v239 = vsel %vm145, %v96, 0
    %241 = vmatprep.subr.bf16.mxu0 0
    %242 = vmatpush1.bf16.msra.mxu0 %v227
    %243 = vmatprep.subr.bf16.mxu0 0
    %244 = vmatpush1.bf16.msra.mxu0 %v228
    %245 = vmatprep.subr.bf16.mxu0 0
    %246 = vmatpush1.bf16.msra.mxu0 %v229
    %247 = vmatprep.subr.bf16.mxu0 0
    %248 = vmatpush1.bf16.msra.mxu0 %v230
    %249 = vmatprep.subr.bf16.mxu0 0
    %250 = vmatpush1.bf16.msra.mxu0 0
    %251 = vmatprep.subr.bf16.mxu0 0
    %252 = vmatpush1.bf16.msra.mxu0 0
    %253 = vmatprep.subr.bf16.mxu0 0
    %254 = vmatpush1.bf16.msra.mxu0 0
    %255 = vmatprep.subr.bf16.mxu0 0
    %256 = vmatpush1.bf16.msra.mxu0 0
    %257 = vmatprep.subr.bf16.mxu0 0
    %258 = vmatpush1.bf16.msra.mxu0 0
    %259 = vmatprep.subr.bf16.mxu0 0
    %260 = vmatpush1.bf16.msra.mxu0 0
    %261 = vmatprep.subr.bf16.mxu0 0
    %262 = vmatpush1.bf16.msra.mxu0 0
    %263 = vmatprep.subr.bf16.mxu0 0
    %264 = vmatpush1.bf16.msra.mxu0 0
    %265 = vmatprep.subr.bf16.mxu0 0
    %266 = vmatpush1.bf16.msra.mxu0 0
    %267 = vmatprep.subr.bf16.mxu0 0
    %268 = vmatpush1.bf16.msra.mxu0 0
    %269 = vmatprep.subr.bf16.mxu0 0
    %270 = vmatpush1.bf16.msra.mxu0 0
    %271 = vmatprep.subr.bf16.mxu0 0
    %272 = vmatpush1.bf16.msra.mxu0 0
    %273 = vmatprep.mubr.bf16.mxu0 0
    %274 = vmatmul.mubr.bf16.gmra.mrb[0].mxu0 %v235
    %v275 = vpop.f32.mrb[0].mxu0
    %v276 = vadd.f32 %v190, %v275
    %v277 = vpop.f32.mrb[0].mxu0
    %v278 = vpop.f32.mrb[0].mxu0
    %v279 = vadd.f32 %v193, %v278
    %v280 = vpop.f32.mrb[0].mxu0
    %281 = vmatprep.mubr.bf16.mxu0 0
    %282 = vmatmul.mubr.bf16.gmra.mrb[0].mxu0 %v237
    %v283 = vpop.f32.mrb[0].mxu0
    %v284 = vadd.f32 %v198, %v283
    %v285 = vpop.f32.mrb[0].mxu0
    %v286 = vpop.f32.mrb[0].mxu0
    %v287 = vadd.f32 %v201, %v286
    %v288 = vpop.f32.mrb[0].mxu0
    %289 = vmatprep.mubr.bf16.mxu0 0
    %290 = vmatmul.mubr.bf16.gmra.mrb[0].mxu0 %v239
    %v291 = vpop.f32.mrb[0].mxu0
    %v292 = vadd.f32 %v206, %v291
    %v293 = vpop.f32.mrb[0].mxu0
    %v294 = vpop.f32.mrb[0].mxu0
    %v295 = vpop.f32.mrb[0].mxu0
    %296 = vdwg.mxu0
    %s297 = scalar_lea.vmem [#allocation5], 64
    %v298 = vld [vmem:[%s297] sm:$0xf]
    %v299 = vld [vmem:[%s297 + $0x4] sm:$0xf]
    %v300 = vld [vmem:[%s297 + $0x8] sm:$0xf]
    %v301 = vld [vmem:[%s297 + $0xc] sm:$0xf]
    %v302 = vld [vmem:[%s297 + $0x10] sm:$0xf]
    %v303 = vld [vmem:[%s297 + $0x14] sm:$0xf]
    %v304 = vld [vmem:[%s297 + $0x18] sm:$0xf]
    %v305 = vld [vmem:[%s297 + $0x1c] sm:$0xf]
    %vm306 = vcmask 1046528
    %v307 = vrot.slane %v94, 1
    %v308 = vrot.slane %v95, 1
    %v309 = vsel %vm306, %v307, %v308
    %v310 = vrot.slane %v96, 1
    %v311 = vsel %vm306, %v308, %v310
    %v320 = vunpack.c.l.b16 %v298
    %v321 = vunpack.c.l.b16 %v299
    %v322 = vunpack.c.l.b16 %v300
    %v323 = vunpack.c.l.b16 %v301
    %v324 = vunpack.c.l.b16 %v302
    %v325 = vunpack.c.l.b16 %v303
    %v326 = vunpack.c.l.b16 %v304
    %v327 = vunpack.c.l.b16 %v305
    %v328 = vpack.c.b16 %v321, %v320
    %v329 = vpack.c.b16 %v323, %v322
    %v330 = vpack.c.b16 %v325, %v324
    %v331 = vpack.c.b16 %v327, %v326
    %v337 = vsel %vm145, %v309, 0
    %v340 = vsel %vm145, %v311, 0
    %v343 = vsel %vm145, %v310, 0
    %345 = vmatprep.subr.bf16.mxu0 0
    %346 = vmatpush1.bf16.msra.mxu0 %v328
    %347 = vmatprep.subr.bf16.mxu0 0
    %348 = vmatpush1.bf16.msra.mxu0 %v329
    %349 = vmatprep.subr.bf16.mxu0 0
    %350 = vmatpush1.bf16.msra.mxu0 %v330
    %351 = vmatprep.subr.bf16.mxu0 0
    %352 = vmatpush1.bf16.msra.mxu0 %v331
    %353 = vmatprep.subr.bf16.mxu0 0
    %354 = vmatpush1.bf16.msra.mxu0 0
    %355 = vmatprep.subr.bf16.mxu0 0
    %356 = vmatpush1.bf16.msra.mxu0 0
    %357 = vmatprep.subr.bf16.mxu0 0
    %358 = vmatpush1.bf16.msra.mxu0 0
    %359 = vmatprep.subr.bf16.mxu0 0
    %360 = vmatpush1.bf16.msra.mxu0 0
    %361 = vmatprep.subr.bf16.mxu0 0
    %362 = vmatpush1.bf16.msra.mxu0 0
    %363 = vmatprep.subr.bf16.mxu0 0
    %364 = vmatpush1.bf16.msra.mxu0 0
    %365 = vmatprep.subr.bf16.mxu0 0
    %366 = vmatpush1.bf16.msra.mxu0 0
    %367 = vmatprep.subr.bf16.mxu0 0
    %368 = vmatpush1.bf16.msra.mxu0 0
    %369 = vmatprep.subr.bf16.mxu0 0
    %370 = vmatpush1.bf16.msra.mxu0 0
    %371 = vmatprep.subr.bf16.mxu0 0
    %372 = vmatpush1.bf16.msra.mxu0 0
    %373 = vmatprep.subr.bf16.mxu0 0
    %374 = vmatpush1.bf16.msra.mxu0 0
    %375 = vmatprep.subr.bf16.mxu0 0
    %376 = vmatpush1.bf16.msra.mxu0 0
    %377 = vmatprep.mubr.bf16.mxu0 0
    %378 = vmatmul.mubr.bf16.gmra.mrb[0].mxu0 %v337
    %v379 = vpop.f32.mrb[0].mxu0
    %v380 = vadd.f32 0.0, %v379
    %v381 = vpop.f32.mrb[0].mxu0
    %v382 = vpop.f32.mrb[0].mxu0
    %v383 = vadd.f32 0.0, %v382
    %v384 = vpop.f32.mrb[0].mxu0
    %385 = vmatprep.mubr.bf16.mxu0 0
    %386 = vmatmul.mubr.bf16.gmra.mrb[0].mxu0 %v340
    %v387 = vpop.f32.mrb[0].mxu0
    %v388 = vadd.f32 0.0, %v387
    %v389 = vpop.f32.mrb[0].mxu0
    %v390 = vpop.f32.mrb[0].mxu0
    %v391 = vadd.f32 0.0, %v390
    %v392 = vpop.f32.mrb[0].mxu0
    %393 = vmatprep.mubr.bf16.mxu0 0
    %394 = vmatmul.mubr.bf16.gmra.mrb[0].mxu0 %v343
    %v395 = vpop.f32.mrb[0].mxu0
    %v396 = vadd.f32 0.0, %v395
    %v397 = vpop.f32.mrb[0].mxu0
    %v398 = vpop.f32.mrb[0].mxu0
    %v399 = vpop.f32.mrb[0].mxu0
    %400 = vdwg.mxu0
    %v401 = vadd.f32 %v276, %v380
    %v402 = vadd.f32 %v279, %v383
    %v403 = vadd.f32 %v284, %v388
    %v404 = vadd.f32 %v287, %v391
    %v405 = vadd.f32 %v292, %v396
    %v406 = vld [vmem:[%s3] sm:$0x1]
    %v408 = vlaneseq
    %v409 = vshrl.u32 %v408, 7
    %v410 = vsub.s32 0, %v409
    %v411 = vrot.slane %v406, %v410
    %v413 = vadd.f32 %v401, %v411
    %v414 = vadd.f32 %v402, %v411
    %v415 = vadd.f32 %v403, %v411
    %v416 = vadd.f32 %v404, %v411
    %v417 = vadd.f32 %v405, %v411
    %v418 = vmax.f32 %v413, 0.0
    %v419 = vmax.f32 %v414, 0.0
    %v420 = vmax.f32 %v415, 0.0
    %v421 = vmax.f32 %v416, 0.0
    %v422 = vmax.f32 %v417, 0.0
    %423 = vst [vmem:[#allocation2 + $0x1] sm:$0xff] %v418
    %424 = vst [vmem:[#allocation2 + $0x9] sm:$0xff] %v419
    %425 = vst [vmem:[#allocation2 + $0x11] sm:$0xff] %v420
    %426 = vst [vmem:[#allocation2 + $0x19] sm:$0xff] %v421
    %427 = vst [vmem:[#allocation2 + $0x21] sm:$0x3] %v422
    %428 = vst [vmem:[#allocation2] sm:$0x1] 0.0
    %429 = vst [vmem:[#allocation2 + $0x11] sm:$0x1] 0.0
    %430 = vst [vmem:[#allocation2 + $0x12] sm:$0x1] 0.0
    %431 = vst [vmem:[#allocation2 + $0x23] sm:$0x1] 0.0
    %v432 = vld [vmem:[#allocation2] sm:$0xff]
    %v433 = vld [vmem:[#allocation2 + $0x8] sm:$0xff]
    %v434 = vld [vmem:[#allocation2 + $0x10] sm:$0xff]
    %v435 = vld [vmem:[#allocation2 + $0x18] sm:$0xff]
    %v436 = vld [vmem:[#allocation2 + $0x20] sm:$0x3]
    %v437 = vpack.c.bf16 %v433, %v432
    %v438 = vpack.c.bf16 %v435, %v434
    %v439 = vpack.c.bf16 %v436, %v436
    %v440 = vld [vmem:[#allocation7] sm:$0xf]
    %v441 = vld [vmem:[#allocation7 + $0x4] sm:$0xf]
    %v442 = vld [vmem:[#allocation7 + $0x8] sm:$0xf]
    %v443 = vld [vmem:[#allocation7 + $0xc] sm:$0xf]
    %v444 = vld [vmem:[#allocation7 + $0x10] sm:$0xf]
    %v445 = vld [vmem:[#allocation7 + $0x14] sm:$0xf]
    %v446 = vld [vmem:[#allocation7 + $0x18] sm:$0xf]
    %v447 = vld [vmem:[#allocation7 + $0x1c] sm:$0xf]
    %v448 = vld [vmem:[#allocation7 + $0x20] sm:$0xf]
    %v449 = vld [vmem:[#allocation7 + $0x24] sm:$0xf]
    %v450 = vld [vmem:[#allocation7 + $0x28] sm:$0xf]
    %v451 = vld [vmem:[#allocation7 + $0x2c] sm:$0xf]
    %v452 = vld [vmem:[#allocation7 + $0x30] sm:$0xf]
    %v453 = vld [vmem:[#allocation7 + $0x34] sm:$0xf]
    %v454 = vld [vmem:[#allocation7 + $0x38] sm:$0xf]
    %v455 = vld [vmem:[#allocation7 + $0x3c] sm:$0xf]
    %v456 = vld [vmem:[#allocation2 + $0x1] sm:$0xff]
    %v457 = vld [vmem:[#allocation2 + $0x9] sm:$0xff]
    %v458 = vld [vmem:[#allocation2 + $0x11] sm:$0xff]
    %v459 = vld [vmem:[#allocation2 + $0x19] sm:$0xff]
    %v460 = vld [vmem:[#allocation2 + $0x21] sm:$0x3]
    %v461 = vpack.c.bf16 %v457, %v456
    %v462 = vpack.c.bf16 %v459, %v458
    %v463 = vpack.c.bf16 %v460, %v460
    %s464 = scalar_lea.vmem [#allocation7], 64
    %v465 = vld [vmem:[%s464] sm:$0xf]
    %v466 = vld [vmem:[%s464 + $0x4] sm:$0xf]
    %v467 = vld [vmem:[%s464 + $0x8] sm:$0xf]
    %v468 = vld [vmem:[%s464 + $0xc] sm:$0xf]
    %v469 = vld [vmem:[%s464 + $0x10] sm:$0xf]
    %v470 = vld [vmem:[%s464 + $0x14] sm:$0xf]
    %v471 = vld [vmem:[%s464 + $0x18] sm:$0xf]
    %v472 = vld [vmem:[%s464 + $0x1c] sm:$0xf]
    %v473 = vld [vmem:[%s464 + $0x20] sm:$0xf]
    %v474 = vld [vmem:[%s464 + $0x24] sm:$0xf]
    %v475 = vld [vmem:[%s464 + $0x28] sm:$0xf]
    %v476 = vld [vmem:[%s464 + $0x2c] sm:$0xf]
    %v477 = vld [vmem:[%s464 + $0x30] sm:$0xf]
    %v478 = vld [vmem:[%s464 + $0x34] sm:$0xf]
    %v479 = vld [vmem:[%s464 + $0x38] sm:$0xf]
    %v480 = vld [vmem:[%s464 + $0x3c] sm:$0xf]
    %v497 = vunpack.c.l.b16 %v465
    %v498 = vunpack.c.l.b16 %v466
    %v499 = vunpack.c.l.b16 %v467
    %v500 = vunpack.c.l.b16 %v468
    %v501 = vunpack.c.l.b16 %v469
    %v502 = vunpack.c.l.b16 %v470
    %v503 = vunpack.c.l.b16 %v471
    %v504 = vunpack.c.l.b16 %v472
    %v505 = vunpack.c.l.b16 %v473
    %v506 = vunpack.c.l.b16 %v474
    %v507 = vunpack.c.l.b16 %v475
    %v508 = vunpack.c.l.b16 %v476
    %v509 = vunpack.c.l.b16 %v477
    %v510 = vunpack.c.l.b16 %v478
    %v511 = vunpack.c.l.b16 %v479
    %v512 = vunpack.c.l.b16 %v480
    %v513 = vpack.c.b16 %v498, %v497
    %v514 = vpack.c.b16 %v500, %v499
    %v515 = vpack.c.b16 %v502, %v501
    %v516 = vpack.c.b16 %v504, %v503
    %v517 = vpack.c.b16 %v506, %v505
    %v518 = vpack.c.b16 %v508, %v507
    %v519 = vpack.c.b16 %v510, %v509
    %v520 = vpack.c.b16 %v512, %v511
    %529 = vmatprep.subr.bf16.mxu0 0
    %530 = vmatpush1.bf16.msra.mxu0 %v513
    %531 = vmatprep.subr.bf16.mxu0 0
    %532 = vmatpush1.bf16.msra.mxu0 %v514
    %533 = vmatprep.subr.bf16.mxu0 0
    %534 = vmatpush1.bf16.msra.mxu0 %v515
    %535 = vmatprep.subr.bf16.mxu0 0
    %536 = vmatpush1.bf16.msra.mxu0 %v516
    %537 = vmatprep.subr.bf16.mxu0 0
    %538 = vmatpush1.bf16.msra.mxu0 %v517
    %539 = vmatprep.subr.bf16.mxu0 0
    %540 = vmatpush1.bf16.msra.mxu0 %v518
    %541 = vmatprep.subr.bf16.mxu0 0
    %542 = vmatpush1.bf16.msra.mxu0 %v519
    %543 = vmatprep.subr.bf16.mxu0 0
    %544 = vmatpush1.bf16.msra.mxu0 %v520
    %545 = vmatprep.subr.bf16.mxu0 0
    %546 = vmatpush1.bf16.msra.mxu0 0
    %547 = vmatprep.subr.bf16.mxu0 0
    %548 = vmatpush1.bf16.msra.mxu0 0
    %549 = vmatprep.subr.bf16.mxu0 0
    %550 = vmatpush1.bf16.msra.mxu0 0
    %551 = vmatprep.subr.bf16.mxu0 0
    %552 = vmatpush1.bf16.msra.mxu0 0
    %553 = vmatprep.subr.bf16.mxu0 0
    %554 = vmatpush1.bf16.msra.mxu0 0
    %555 = vmatprep.subr.bf16.mxu0 0
    %556 = vmatpush1.bf16.msra.mxu0 0
    %557 = vmatprep.subr.bf16.mxu0 0
    %558 = vmatpush1.bf16.msra.mxu0 0
    %559 = vmatprep.subr.bf16.mxu0 0
    %560 = vmatpush1.bf16.msra.mxu0 0
    %561 = vmatprep.mubr.bf16.mxu0 0
    %562 = vmatmul.mubr.bf16.gmra.mrb[0].mxu0 %v461
    %v563 = vpop.f32.mrb[0].mxu0
    %v564 = vadd.f32 0.0, %v563
    %v565 = vpop.f32.mrb[0].mxu0
    %v566 = vpop.f32.mrb[0].mxu0
    %v567 = vadd.f32 0.0, %v566
    %v568 = vpop.f32.mrb[0].mxu0
    %569 = vmatprep.mubr.bf16.mxu0 0
    %570 = vmatmul.mubr.bf16.gmra.mrb[0].mxu0 %v462
    %v571 = vpop.f32.mrb[0].mxu0
    %v572 = vadd.f32 0.0, %v571
    %v573 = vpop.f32.mrb[0].mxu0
    %v574 = vpop.f32.mrb[0].mxu0
    %v575 = vadd.f32 0.0, %v574
    %v576 = vpop.f32.mrb[0].mxu0
    %577 = vmatprep.mubr.bf16.mxu0 0
    %578 = vmatmul.mubr.bf16.gmra.mrb[0].mxu0 %v463
    %v579 = vpop.f32.mrb[0].mxu0
    %v580 = vadd.f32 0.0, %v579
    %v581 = vpop.f32.mrb[0].mxu0
    %v582 = vpop.f32.mrb[0].mxu0
    %v583 = vpop.f32.mrb[0].mxu0
    %584 = vdwg.mxu0
    %v601 = vunpack.c.l.b16 %v440
    %v602 = vunpack.c.l.b16 %v441
    %v603 = vunpack.c.l.b16 %v442
    %v604 = vunpack.c.l.b16 %v443
    %v605 = vunpack.c.l.b16 %v444
    %v606 = vunpack.c.l.b16 %v445
    %v607 = vunpack.c.l.b16 %v446
    %v608 = vunpack.c.l.b16 %v447
    %v609 = vunpack.c.l.b16 %v448
    %v610 = vunpack.c.l.b16 %v449
    %v611 = vunpack.c.l.b16 %v450
    %v612 = vunpack.c.l.b16 %v451
    %v613 = vunpack.c.l.b16 %v452
    %v614 = vunpack.c.l.b16 %v453
    %v615 = vunpack.c.l.b16 %v454
    %v616 = vunpack.c.l.b16 %v455
    %v617 = vpack.c.b16 %v602, %v601
    %v618 = vpack.c.b16 %v604, %v603
    %v619 = vpack.c.b16 %v606, %v605
    %v620 = vpack.c.b16 %v608, %v607
    %v621 = vpack.c.b16 %v610, %v609
    %v622 = vpack.c.b16 %v612, %v611
    %v623 = vpack.c.b16 %v614, %v613
    %v624 = vpack.c.b16 %v616, %v615
    %633 = vmatprep.subr.bf16.mxu0 0
    %634 = vmatpush1.bf16.msra.mxu0 %v617
    %635 = vmatprep.subr.bf16.mxu0 0
    %636 = vmatpush1.bf16.msra.mxu0 %v618
    %637 = vmatprep.subr.bf16.mxu0 0
    %638 = vmatpush1.bf16.msra.mxu0 %v619
    %639 = vmatprep.subr.bf16.mxu0 0
    %640 = vmatpush1.bf16.msra.mxu0 %v620
    %641 = vmatprep.subr.bf16.mxu0 0
    %642 = vmatpush1.bf16.msra.mxu0 %v621
    %643 = vmatprep.subr.bf16.mxu0 0
    %644 = vmatpush1.bf16.msra.mxu0 %v622
    %645 = vmatprep.subr.bf16.mxu0 0
    %646 = vmatpush1.bf16.msra.mxu0 %v623
    %647 = vmatprep.subr.bf16.mxu0 0
    %648 = vmatpush1.bf16.msra.mxu0 %v624
    %649 = vmatprep.subr.bf16.mxu0 0
    %650 = vmatpush1.bf16.msra.mxu0 0
    %651 = vmatprep.subr.bf16.mxu0 0
    %652 = vmatpush1.bf16.msra.mxu0 0
    %653 = vmatprep.subr.bf16.mxu0 0
    %654 = vmatpush1.bf16.msra.mxu0 0
    %655 = vmatprep.subr.bf16.mxu0 0
    %656 = vmatpush1.bf16.msra.mxu0 0
    %657 = vmatprep.subr.bf16.mxu0 0
    %658 = vmatpush1.bf16.msra.mxu0 0
    %659 = vmatprep.subr.bf16.mxu0 0
    %660 = vmatpush1.bf16.msra.mxu0 0
    %661 = vmatprep.subr.bf16.mxu0 0
    %662 = vmatpush1.bf16.msra.mxu0 0
    %663 = vmatprep.subr.bf16.mxu0 0
    %664 = vmatpush1.bf16.msra.mxu0 0
    %665 = vmatprep.mubr.bf16.mxu0 0
    %666 = vmatmul.mubr.bf16.gmra.mrb[0].mxu0 %v437
    %v667 = vpop.f32.mrb[0].mxu0
    %v668 = vadd.f32 %v564, %v667
    %v669 = vpop.f32.mrb[0].mxu0
    %v670 = vpop.f32.mrb[0].mxu0
    %v671 = vadd.f32 %v567, %v670
    %v672 = vpop.f32.mrb[0].mxu0
    %673 = vmatprep.mubr.bf16.mxu0 0
    %674 = vmatmul.mubr.bf16.gmra.mrb[0].mxu0 %v438
    %v675 = vpop.f32.mrb[0].mxu0
    %v676 = vadd.f32 %v572, %v675
    %v677 = vpop.f32.mrb[0].mxu0
    %v678 = vpop.f32.mrb[0].mxu0
    %v679 = vadd.f32 %v575, %v678
    %v680 = vpop.f32.mrb[0].mxu0
    %681 = vmatprep.mubr.bf16.mxu0 0
    %682 = vmatmul.mubr.bf16.gmra.mrb[0].mxu0 %v439
    %v683 = vpop.f32.mrb[0].mxu0
    %v684 = vadd.f32 %v580, %v683
    %v685 = vpop.f32.mrb[0].mxu0
    %v686 = vpop.f32.mrb[0].mxu0
    %v687 = vpop.f32.mrb[0].mxu0
    %688 = vdwg.mxu0
    %v689 = vld [vmem:[#allocation2 + $0x2] sm:$0xff]
    %v690 = vld [vmem:[#allocation2 + $0xa] sm:$0xff]
    %v691 = vld [vmem:[#allocation2 + $0x12] sm:$0xff]
    %v692 = vld [vmem:[#allocation2 + $0x1a] sm:$0xff]
    %v693 = vld [vmem:[#allocation2 + $0x22] sm:$0x3]
    %v694 = vpack.c.bf16 %v690, %v689
    %v695 = vpack.c.bf16 %v692, %v691
    %v696 = vpack.c.bf16 %v693, %v693
    %s697 = scalar_lea.vmem [#allocation7], 128
    %v698 = vld [vmem:[%s697] sm:$0xf]
    %v699 = vld [vmem:[%s697 + $0x4] sm:$0xf]
    %v700 = vld [vmem:[%s697 + $0x8] sm:$0xf]
    %v701 = vld [vmem:[%s697 + $0xc] sm:$0xf]
    %v702 = vld [vmem:[%s697 + $0x10] sm:$0xf]
    %v703 = vld [vmem:[%s697 + $0x14] sm:$0xf]
    %v704 = vld [vmem:[%s697 + $0x18] sm:$0xf]
    %v705 = vld [vmem:[%s697 + $0x1c] sm:$0xf]
    %v706 = vld [vmem:[%s697 + $0x20] sm:$0xf]
    %v707 = vld [vmem:[%s697 + $0x24] sm:$0xf]
    %v708 = vld [vmem:[%s697 + $0x28] sm:$0xf]
    %v709 = vld [vmem:[%s697 + $0x2c] sm:$0xf]
    %v710 = vld [vmem:[%s697 + $0x30] sm:$0xf]
    %v711 = vld [vmem:[%s697 + $0x34] sm:$0xf]
    %v712 = vld [vmem:[%s697 + $0x38] sm:$0xf]
    %v713 = vld [vmem:[%s697 + $0x3c] sm:$0xf]
    %v730 = vunpack.c.l.b16 %v698
    %v731 = vunpack.c.l.b16 %v699
    %v732 = vunpack.c.l.b16 %v700
    %v733 = vunpack.c.l.b16 %v701
    %v734 = vunpack.c.l.b16 %v702
    %v735 = vunpack.c.l.b16 %v703
    %v736 = vunpack.c.l.b16 %v704
    %v737 = vunpack.c.l.b16 %v705
    %v738 = vunpack.c.l.b16 %v706
    %v739 = vunpack.c.l.b16 %v707
    %v740 = vunpack.c.l.b16 %v708
    %v741 = vunpack.c.l.b16 %v709
    %v742 = vunpack.c.l.b16 %v710
    %v743 = vunpack.c.l.b16 %v711
    %v744 = vunpack.c.l.b16 %v712
    %v745 = vunpack.c.l.b16 %v713
    %v746 = vpack.c.b16 %v731, %v730
    %v747 = vpack.c.b16 %v733, %v732
    %v748 = vpack.c.b16 %v735, %v734
    %v749 = vpack.c.b16 %v737, %v736
    %v750 = vpack.c.b16 %v739, %v738
    %v751 = vpack.c.b16 %v741, %v740
    %v752 = vpack.c.b16 %v743, %v742
    %v753 = vpack.c.b16 %v745, %v744
    %762 = vmatprep.subr.bf16.mxu0 0
    %763 = vmatpush1.bf16.msra.mxu0 %v746
    %764 = vmatprep.subr.bf16.mxu0 0
    %765 = vmatpush1.bf16.msra.mxu0 %v747
    %766 = vmatprep.subr.bf16.mxu0 0
    %767 = vmatpush1.bf16.msra.mxu0 %v748
    %768 = vmatprep.subr.bf16.mxu0 0
    %769 = vmatpush1.bf16.msra.mxu0 %v749
    %770 = vmatprep.subr.bf16.mxu0 0
    %771 = vmatpush1.bf16.msra.mxu0 %v750
    %772 = vmatprep.subr.bf16.mxu0 0
    %773 = vmatpush1.bf16.msra.mxu0 %v751
    %774 = vmatprep.subr.bf16.mxu0 0
    %775 = vmatpush1.bf16.msra.mxu0 %v752
    %776 = vmatprep.subr.bf16.mxu0 0
    %777 = vmatpush1.bf16.msra.mxu0 %v753
    %778 = vmatprep.subr.bf16.mxu0 0
    %779 = vmatpush1.bf16.msra.mxu0 0
    %780 = vmatprep.subr.bf16.mxu0 0
    %781 = vmatpush1.bf16.msra.mxu0 0
    %782 = vmatprep.subr.bf16.mxu0 0
    %783 = vmatpush1.bf16.msra.mxu0 0
    %784 = vmatprep.subr.bf16.mxu0 0
    %785 = vmatpush1.bf16.msra.mxu0 0
    %786 = vmatprep.subr.bf16.mxu0 0
    %787 = vmatpush1.bf16.msra.mxu0 0
    %788 = vmatprep.subr.bf16.mxu0 0
    %789 = vmatpush1.bf16.msra.mxu0 0
    %790 = vmatprep.subr.bf16.mxu0 0
    %791 = vmatpush1.bf16.msra.mxu0 0
    %792 = vmatprep.subr.bf16.mxu0 0
    %793 = vmatpush1.bf16.msra.mxu0 0
    %794 = vmatprep.mubr.bf16.mxu0 0
    %795 = vmatmul.mubr.bf16.gmra.mrb[0].mxu0 %v694
    %v796 = vpop.f32.mrb[0].mxu0
    %v797 = vadd.f32 0.0, %v796
    %v798 = vpop.f32.mrb[0].mxu0
    %v799 = vpop.f32.mrb[0].mxu0
    %v800 = vadd.f32 0.0, %v799
    %v801 = vpop.f32.mrb[0].mxu0
    %802 = vmatprep.mubr.bf16.mxu0 0
    %803 = vmatmul.mubr.bf16.gmra.mrb[0].mxu0 %v695
    %v804 = vpop.f32.mrb[0].mxu0
    %v805 = vadd.f32 0.0, %v804
    %v806 = vpop.f32.mrb[0].mxu0
    %v807 = vpop.f32.mrb[0].mxu0
    %v808 = vadd.f32 0.0, %v807
    %v809 = vpop.f32.mrb[0].mxu0
    %810 = vmatprep.mubr.bf16.mxu0 0
    %811 = vmatmul.mubr.bf16.gmra.mrb[0].mxu0 %v696
    %v812 = vpop.f32.mrb[0].mxu0
    %v813 = vadd.f32 0.0, %v812
    %v814 = vpop.f32.mrb[0].mxu0
    %v815 = vpop.f32.mrb[0].mxu0
    %v816 = vpop.f32.mrb[0].mxu0
    %817 = vdwg.mxu0
    %v818 = vadd.f32 %v668, %v797
    %v819 = vadd.f32 %v671, %v800
    %v820 = vadd.f32 %v676, %v805
    %v821 = vadd.f32 %v679, %v808
    %v822 = vadd.f32 %v684, %v813
    %v823 = vld [vmem:[%s4] sm:$0x1]
    %v825 = vlaneseq
    %v826 = vshrl.u32 %v825, 7
    %v827 = vsub.s32 0, %v826
    %v828 = vrot.slane %v823, %v827
    %v830 = vadd.f32 %v818, %v828
    %v831 = vadd.f32 %v819, %v828
    %v832 = vadd.f32 %v820, %v828
    %v833 = vadd.f32 %v821, %v828
    %v834 = vadd.f32 %v822, %v828
    %v835 = vmax.f32 %v830, 0.0
    %v836 = vmax.f32 %v831, 0.0
    %v837 = vmax.f32 %v832, 0.0
    %v838 = vmax.f32 %v833, 0.0
    %v839 = vmax.f32 %v834, 0.0
    %840 = vst [vmem:[%s5 + $0x1] sm:$0xff] %v835
    %841 = vst [vmem:[%s5 + $0x9] sm:$0xff] %v836
    %842 = vst [vmem:[%s5 + $0x11] sm:$0xff] %v837
    %843 = vst [vmem:[%s5 + $0x19] sm:$0xff] %v838
    %844 = vst [vmem:[%s5 + $0x21] sm:$0x3] %v839
    %845 = vst [vmem:[%s5] sm:$0x1] 0.0
    %846 = vst [vmem:[%s5 + $0x23] sm:$0x1] 0.0
    // Predicated region
    $region34: #{tpu_custom_call.1} parent=1 // pred_check
      _
    $region35: #{tpu_custom_call.1} parent=1 // pred_check_branch
      %848 = sbr.rel (0) target = $region37
    $region36: #{tpu_custom_call.1} parent=1 // pred_region
      _
    $region37: #{tpu_custom_call.1} parent=1 // pred_fallthru
      _
    // Predicated region
    $region38: #{tpu_custom_call.1} parent=1 // pred_check
      _
    $region39: #{tpu_custom_call.1} parent=1 // pred_check_branch
      %850 = sbr.rel (0) target = $region41
    $region40: #{tpu_custom_call.1} parent=1 // pred_region
      _
    $region41: #{tpu_custom_call.1} parent=1 // pred_fallthru
      _
    %851 = vsyncpa [#allocation4], 1
    %852 = vsyncpa [#allocation6], 1

</llo_original>
